<compile_context>
chip_gen: v7x
topology: tpu7x:2x2x1
jax: 0.10.0
libtpu: 0.0.40
codegen_flags: <defaults>
</compile_context>

<pallas_src>
import jax
import jax.numpy as jnp
import numpy as np
from jax.experimental import pallas as pl
from jax.experimental.pallas import tpu as pltpu


# ---------------------------------------------------------------------------
# Kernels (one per attention method)
# ---------------------------------------------------------------------------

def _dotted_kernel(enc_ref, dec_ref, out_ref):
    # enc_ref: (Bt, Lt, E)  dec_ref: (Bt, E)  out_ref: (Bt, Lt)
    enc = enc_ref[...]
    dec = dec_ref[...]
    # Broadcast-multiply on the VPU in the native dtype (bf16 VALU on v6e/v7x),
    # accumulate the cross-lane reduce in f32.
    prod = (enc * dec[:, None, :]).astype(jnp.float32)           # (Bt, Lt, E)
    energy = jnp.sum(prod, axis=-1)                              # (Bt, Lt)
    # TODO(synk): if the v7x bundle dump shows the XLU (cross-lane reduce /
    # relayout) binding, restage the reduce (VPU-add lane chunks, single final
    # cross-lane reduce) or contract E on the idle MXU.
    out_ref[...] = energy.astype(out_ref.dtype)


def _general_kernel(enc_ref, dec_ref, w_ref, b_ref, out_ref):
    # enc_ref: (Bt, Lt, E)  dec_ref: (Bt, D)
    # w_ref: (D, E) (torch Linear weight, used WITHOUT transpose)  b_ref: (1, D)
    # energy[l] = sum_d dec_d * (enc @ W.T + b)[l, d]
    #           = sum_e enc[l, e] * (dec @ W)[e]  +  dec . b
    enc = enc_ref[...]
    dec = dec_ref[...]
    w = w_ref[...]
    b = b_ref[...].astype(jnp.float32)

    # Native-dtype operands to the MXU, f32 accumulation.
    v = jnp.dot(dec, w, preferred_element_type=jnp.float32)      # (Bt, E) f32
    c = jnp.sum(dec.astype(jnp.float32) * b, axis=-1,
                keepdims=True)                                   # (Bt, 1)
    prod = (enc * v.astype(enc.dtype)[:, None, :]).astype(jnp.float32)
    energy = jnp.sum(prod, axis=-1) + c                          # (Bt, Lt)
    out_ref[...] = energy.astype(out_ref.dtype)


def _concat_kernel(enc_ref, dec_ref, w1e_ref, w1d_ref, b1_ref, w2_ref, b2_ref,
                   out_ref):
    # enc_ref: (Bt, Lt, E)  dec_ref: (Bt, D)
    # w1e_ref: (E, H) = W1[:, :E].T   w1d_ref: (D, H) = W1[:, E:].T
    # b1_ref: (1, H)   w2_ref: (1, H)   b2_ref: (1, 1)
    enc = enc_ref[...]
    dec = dec_ref[...]
    w1e = w1e_ref[...]
    w1d = w1d_ref[...]
    b1 = b1_ref[...].astype(jnp.float32)
    w2 = w2_ref[...].astype(jnp.float32)
    b2 = b2_ref[...].astype(jnp.float32)

    bt, lt, e = enc.shape
    h_dim = w1e.shape[1]

    # dec contribution of Linear(cat([enc, dec])) computed ONCE per batch row.
    dec_h = jnp.dot(dec, w1d, preferred_element_type=jnp.float32) + b1    # (Bt, H)

    # enc contribution as a single dense 2-D matmul. Lt is padded to a multiple
    # of 8 in the wrapper, so this reshape is a pure relayout (no VMEM copy);
    # MXU operands stay in the native (possibly bf16) dtype, f32 accumulation.
    enc_h = jnp.dot(enc.reshape(bt * lt, e), w1e,
                    preferred_element_type=jnp.float32).reshape(bt, lt, h_dim)

    h = jnp.tanh(enc_h + dec_h[:, None, :])                               # (Bt, Lt, H) f32
    # Final Linear(H -> 1) as a lane reduce: (Bt, Lt) directly, lane-dense store.
    energy = jnp.sum(h * w2[None, :, :], axis=-1) + b2                    # (Bt, Lt)
    out_ref[...] = energy.astype(out_ref.dtype)


# ---------------------------------------------------------------------------
# Tiling / VMEM sizing helpers
# ---------------------------------------------------------------------------

def _round_up(x, m):
    return ((x + m - 1) // m) * m


def _pad_length(L):
    """Padded sequence length: lane-dense (x128) when cheap, else sublane (x8)."""
    if L % 128 == 0:
        return L
    if L > 64:                       # padding to 128 costs < ~2x extra traffic
        return _round_up(L, 128)
    return _round_up(L, 8)           # tiny L: just keep sublane alignment


def _vmem_budget():
    """(per-step block budget, scoped vmem_limit cap) — generation-aware."""
    try:
        cap = int(getattr(pltpu.get_tpu_info(), "vmem_capacity_bytes", 64 << 20))
    except Exception:  # pragma: no cover - be conservative if query unavailable
        cap = 64 << 20
    if cap >= (100 << 20):           # v5e / v6e: 128 MiB physical VMEM
        return 56 << 20, 96 << 20    # big slabs -> closer to HBM roofline
    # v7x: 64 MiB per TensorCore -> tighter accounting / more headroom
    return 20 << 20, 40 << 20


def _choose_tiles(method, B, L_pad, E, D, H, in_isz, out_isz, budget):
    """Pick (Bt, Lt) and return the estimated per-step VMEM need in bytes."""

    def block_bytes(bt, lt):
        enc = 2 * bt * lt * E * in_isz            # double-buffered enc block
        dec = 2 * bt * D * in_isz                 # double-buffered dec block
        out = 2 * bt * lt * out_isz               # double-buffered out block
        if method == "concat":
            tmp = 2 * bt * lt * H * 4             # enc_h + tanh(h) in f32
            tmp += bt * lt * E * 4                # reshape / cast margin
        else:
            tmp = bt * lt * E * 4                 # f32 broadcast product
        return enc + dec + out + tmp

    bt_min = B if B < 8 else 8

    # Sequence tiling: only when even the minimum batch slab doesn't fit.
    Lt = L_pad
    if block_bytes(bt_min, Lt) > budget and L_pad % 128 == 0:
        while Lt > 128 and block_bytes(bt_min, Lt) > budget:
            Lt = max(128, ((Lt // 2) // 128) * 128)
    # TODO(synk): tile E as well for the (rare) case where even a
    # (bt_min, 128, E) slab exceeds the VMEM budget.

    # Batch tiling: biggest multiple of 8 that fits the budget, then shrink so
    # we get >= 4 grid steps (DMA/compute overlap + v7x 2-TensorCore sharding).
    if B < 8:
        Bt = B                                    # full-dim block is always legal
    else:
        Bt = 8
        while Bt * 2 <= B and block_bytes(Bt * 2, Lt) <= budget:
            Bt *= 2
        n_l = pl.cdiv(L_pad, Lt)
        while Bt > 8 and pl.cdiv(B, Bt) * n_l < 4:
            Bt //= 2

    return Bt, Lt, block_bytes(Bt, Lt)


# ---------------------------------------------------------------------------
# Wrapper
# ---------------------------------------------------------------------------

def attn_forward(method, encode_outputs, decode_state, params=None):
    """Pallas equivalent of Attn.forward. Returns energy of shape (B, L)."""
    method = method.lower()
    if method not in ("dotted", "general", "concat"):
        raise RuntimeError(
            "Attention methods should be dotted, general or concat but get {}!".format(method))

    B, L, E = encode_outputs.shape
    D = decode_state.shape[1]
    if method == "dotted" and E != D:
        raise RuntimeError(
            "In dotted attention, the encode_hidden_size should equal to decode_hidden_size.")

    out_dtype = encode_outputs.dtype
    in_isz = jnp.dtype(encode_outputs.dtype).itemsize
    out_isz = jnp.dtype(out_dtype).itemsize

    # Pad L for lane-dense output stores / sublane-aligned enc blocks.
    L_pad = _pad_length(L)
    if L_pad != L:
        encode_outputs = jnp.pad(
            encode_outputs, ((0, 0), (0, L_pad - L), (0, 0)))

    H = params["w1"].shape[0] if method == "concat" else 0
    budget, vmem_cap = _vmem_budget()
    Bt, Lt, need_bytes = _choose_tiles(
        method, B, L_pad, E, D, H, in_isz, out_isz, budget)

    grid = (pl.cdiv(B, Bt), pl.cdiv(L_pad, Lt))

    enc_spec = pl.BlockSpec((Bt, Lt, E), lambda i, j: (i, j, 0))
    dec_spec = pl.BlockSpec((Bt, D), lambda i, j: (i, 0))
    out_spec = pl.BlockSpec((Bt, Lt), lambda i, j: (i, j))
    out_shape = jax.ShapeDtypeStruct((B, L_pad), out_dtype)

    def full_spec(arr):   # small weights: same full block every grid step
        nd = arr.ndim
        return pl.BlockSpec(arr.shape, lambda i, j, _nd=nd: (0,) * _nd)

    # Resident weight bytes (small, double-buffered) + slack for (8,128) padding.
    weight_bytes = 0
    if method == "general":
        p_isz = jnp.dtype(params["w"].dtype).itemsize
        weight_bytes = 2 * (D * E + D) * p_isz
    elif method == "concat":
        p_isz = jnp.dtype(params["w1"].dtype).itemsize
        weight_bytes = 2 * ((E + D) * H + 3 * H + 1) * p_isz

    vmem_limit = int(min(max(need_bytes + weight_bytes + (4 << 20), 32 << 20),
                         vmem_cap))

    cparams = pltpu.CompilerParams(
        dimension_semantics=("parallel", "parallel"),
        vmem_limit_bytes=vmem_limit,
    )

    if method == "dotted":
        energy = pl.pallas_call(
            _dotted_kernel,
            out_shape=out_shape,
            grid=grid,
            in_specs=[enc_spec, dec_spec],
            out_specs=out_spec,
            compiler_params=cparams,
        )(encode_outputs, decode_state)

    elif method == "general":
        w = params["w"]                                   # (D, E), torch layout
        b = jnp.reshape(params["b"], (1, D))              # (1, D)
        energy = pl.pallas_call(
            _general_kernel,
            out_shape=out_shape,
            grid=grid,
            in_specs=[enc_spec, dec_spec, full_spec(w), full_spec(b)],
            out_specs=out_spec,
            compiler_params=cparams,
        )(encode_outputs, decode_state, w, b)

    else:  # concat
        w1, b1, w2, b2 = params["w1"], params["b1"], params["w2"], params["b2"]
        # One-time wrapper-side split + transpose (kills in-kernel concatenate / .T).
        w1e_t = jnp.transpose(w1[:, :E])                  # (E, H)
        w1d_t = jnp.transpose(w1[:, E:])                  # (D, H)
        b1_r = jnp.reshape(b1, (1, H))                    # (1, H)
        w2_r = jnp.reshape(w2, (1, H))                    # (1, H)
        b2_r = jnp.reshape(b2, (1, 1))                    # (1, 1)
        energy = pl.pallas_call(
            _concat_kernel,
            out_shape=out_shape,
            grid=grid,
            in_specs=[enc_spec, dec_spec,
                      full_spec(w1e_t), full_spec(w1d_t),
                      full_spec(b1_r), full_spec(w2_r), full_spec(b2_r)],
            out_specs=out_spec,
            compiler_params=cparams,
        )(encode_outputs, decode_state, w1e_t, w1d_t, b1_r, w2_r, b2_r)

    if L_pad != L:
        energy = energy[:, :L]
    return energy


# ---------------------------------------------------------------------------
# Pure-JAX references (for correctness check) -- torch parameter layout
# ---------------------------------------------------------------------------

def attn_reference(method, enc, dec, params=None):
    if method == "dotted":
        return jnp.sum(dec[:, None, :] * enc, axis=2)
    if method == "general":
        mapped = enc @ params["w"].T + params["b"]
        return jnp.sum(dec[:, None, :] * mapped, axis=2)
    # concat
    B, L, _ = enc.shape
    dec_t = jnp.broadcast_to(dec[:, None, :], (B, L, dec.shape[1]))
    cat = jnp.concatenate([enc, dec_t], axis=2)
    h = jnp.tanh(cat @ params["w1"].T + params["b1"])
    return (h @ params["w2"].T + params["b2"])[..., 0]


# ---------------------------------------------------------------------------
# Main
# ---------------------------------------------------------------------------

if __name__ == "__main__":
    B, L, E, D = 2, 8, 32, 32
    H = (E + D) // 2

    key = jax.random.PRNGKey(0)
    k_enc, k_dec, k_w, k_b, k_w1, k_b1, k_w2, k_b2 = jax.random.split(key, 8)

    enc = jax.random.normal(k_enc, (B, L, E), dtype=jnp.float32)
    dec = jax.random.normal(k_dec, (B, D), dtype=jnp.float32)

    # torch.nn.Linear weight layout: (out_features, in_features); bias: (out_features,)
    params_general = {
        "w": 0.1 * jax.random.normal(k_w, (D, E), dtype=jnp.float32),
        "b": 0.1 * jax.random.normal(k_b, (D,), dtype=jnp.float32),
    }
    params_concat = {
        "w1": 0.1 * jax.random.normal(k_w1, (H, E + D), dtype=jnp.float32),
        "b1": 0.1 * jax.random.normal(k_b1, (H,), dtype=jnp.float32),
        "w2": 0.1 * jax.random.normal(k_w2, (1, H), dtype=jnp.float32),
        "b2": 0.1 * jax.random.normal(k_b2, (1,), dtype=jnp.float32),
    }

    all_params = {"dotted": None, "general": params_general, "concat": params_concat}

    ok = True
    for method in ("dotted", "general", "concat"):
        out = attn_forward(method, enc, dec, all_params[method])
        out = jax.block_until_ready(out)
        ref = attn_reference(method, enc, dec, all_params[method])
        if out.shape != (B, L):
            ok = False
        if not np.allclose(np.asarray(out), np.asarray(ref), rtol=1e-5, atol=1e-5):
            ok = False

    if ok:
        print("KERNEL_OK")
</pallas_src>

<mosaic_0001>
module attributes {stable_mosaic.version = 11 : i64} {
  func.func @_dotted_kernel(%arg0: i32, %arg1: i32, %arg2: memref<2x8x32xf32, #tpu.memory_space<vmem>>, %arg3: memref<2x32xf32, #tpu.memory_space<vmem>>, %arg4: memref<2x8xf32, #tpu.memory_space<vmem>>) attributes {dimension_semantics = [#tpu.dimension_semantics<parallel>, #tpu.dimension_semantics<parallel>], iteration_bounds = array<i64: 1, 1>, scalar_prefetch = 0 : i64, scratch_operands = 0 : i64, tpu.core_type = #tpu.core_type<tc>, window_params = [{transform_indices = @transform_0, window_bounds = array<i64: 2, 8, 32>}, {transform_indices = @transform_1, window_bounds = array<i64: 2, 32>}, {transform_indices = @transform_2, window_bounds = array<i64: 2, 8>}]} {
    %c0 = arith.constant 0 : index
    %c0_0 = arith.constant 0 : index
    %c0_1 = arith.constant 0 : index
    %0 = vector.load %arg2[%c0, %c0_0, %c0_1] : memref<2x8x32xf32, #tpu.memory_space<vmem>>, vector<2x8x32xf32>
    %c0_2 = arith.constant 0 : index
    %c0_3 = arith.constant 0 : index
    %1 = vector.load %arg3[%c0_2, %c0_3] : memref<2x32xf32, #tpu.memory_space<vmem>>, vector<2x32xf32>
    %2 = vector.shape_cast %1 : vector<2x32xf32> to vector<2x1x32xf32>
    %3 = vector.broadcast %2 : vector<2x1x32xf32> to vector<2x8x32xf32>
    %4 = arith.mulf %0, %3 : vector<2x8x32xf32>
    %cst = arith.constant dense<0.000000e+00> : vector<2x8xf32>
    %5 = vector.multi_reduction <add>, %4, %cst [2] : vector<2x8x32xf32> to vector<2x8xf32>
    %c0_4 = arith.constant 0 : index
    %c0_5 = arith.constant 0 : index
    %6 = vector.load %arg4[%c0_4, %c0_5] : memref<2x8xf32, #tpu.memory_space<vmem>>, vector<2x8xf32>
    tpu.vector_store %arg4[%c0_4, %c0_5], %5 {strides = array<i32>} : memref<2x8xf32, #tpu.memory_space<vmem>>, vector<2x8xf32>,
    return
  }
  func.func @transform_0(%arg0: i32, %arg1: i32) -> (i32, i32, i32) {
    %c0_i32 = arith.constant 0 : i32
    %c0_i32_0 = arith.constant 0 : i32
    return %arg0, %arg1, %c0_i32 : i32, i32, i32
  }
  func.func @transform_1(%arg0: i32, %arg1: i32) -> (i32, i32) {
    %c0_i32 = arith.constant 0 : i32
    %c0_i32_0 = arith.constant 0 : i32
    return %arg0, %c0_i32 : i32, i32
  }
  func.func @transform_2(%arg0: i32, %arg1: i32) -> (i32, i32) {
    %c0_i32 = arith.constant 0 : i32
    return %arg0, %arg1 : i32, i32
  }
}

</mosaic_0001>

<llo_original>
// kernel: tpu_custom_call.1
$region0: #{tpu_custom_call.1}
  #allocation0 [shape = 'u32[]', space=smem, size = 0x4, offset = 0x4, fixed_abs, tag = 'smem constant byte address 0x4 - core index']
  #allocation1 [shape = 'u32[144,128]{1,0:T(1,128)}', space=vmem, size = 0x12000, scoped, tag = 'internal scratch']
  %s0 = inlined_call_operand.hbm [shape: f32[2,8,32], index: 0, kind: input, shape index: {}]
  %s1 = inlined_call_operand.vmem [shape: f32[2,32], index: 1, kind: input, shape index: {}]
  %s2 = inlined_call_operand.hbm [shape: f32[2,8], index: 2, kind: output, shape index: {}]
  %s3 = sld [smem:[#allocation0]]
  $region22: #{tpu_custom_call.1} parent=0
    _
  %s5 = ssub.s32 1, %s3
  %s6 = scalar_select 0, %s5, %s3
  $region1: #{tpu_custom_call.1} parent=0
    #allocation2 [shape = 'u8[8192]{0}', space=vmem, size = 0x2000, scoped, tag = 'input window, operand 0, single buffered']
    #allocation3 [shape = 's32[1]{0}', space=sflag, size = 0x4, scoped, tag = 'scoped memory for tpu_custom_call.1']
    #allocation4 [shape = 's32[1]{0}', space=sflag, size = 0x4, scoped, tag = 'scoped memory for tpu_custom_call.1']
    #allocation5 [shape = 'u8[1024]{0}', space=vmem, size = 0x400, scoped, tag = 'output window, operand 0, single buffered']
    %7 = vsyncpa [#allocation3], 0
    %8 = vsyncpa [#allocation4], 0
    // Predicated region
    $region2: #{tpu_custom_call.1} parent=1 // pred_check
      _
    $region3: #{tpu_custom_call.1} parent=1 // pred_check_branch
      %10 = sbr.rel (0) target = $region5
    $region4: #{tpu_custom_call.1} parent=1 // pred_region
      %s12 = ssub.s32 256, 256
      %13 = vsyncadd [#allocation3], %s12
      %s14 = sshll.u32 [#allocation2], 4
      %s15 = int_to_ptr.vmem [resolvable:$true] %s14
      %20 = dma.hbm_to_vmem [thread:$0]  %s0, 256, %s15, [#allocation3], 128, 128, 8
    $region5: #{tpu_custom_call.1} parent=1 // pred_fallthru
      _
    // Predicated region
    $region6: #{tpu_custom_call.1} parent=1 // pred_check
      _
    $region7: #{tpu_custom_call.1} parent=1 // pred_check_branch
      %22 = sbr.rel (0) target = $region9
    $region8: #{tpu_custom_call.1} parent=1 // pred_region
      _
    $region9: #{tpu_custom_call.1} parent=1 // pred_fallthru
      _
    // Predicated region
    $region10: #{tpu_custom_call.1} parent=1 // pred_check
      _
    $region11: #{tpu_custom_call.1} parent=1 // pred_check_branch
      %24 = sbr.rel (0) target = $region13
    $region12: #{tpu_custom_call.1} parent=1 // pred_region
      %25 = dma.done [#allocation3], 256
    $region13: #{tpu_custom_call.1} parent=1 // pred_fallthru
      _
    %v26 = vld [vmem:[#allocation2] sm:$0xff]
    %v27 = vld [vmem:[#allocation2 + $0x8] sm:$0xff]
    %v28 = vld [vmem:[%s1] sm:$0x3]
    %v31 = vunpack.c.l.s4 1966171168
    %v32 = vunpack.c.0.s8 %v31
    %v33 = vlaneseq
    %v34 = vshrl.u32 %v33, 7
    %v35 = vsub.s32 %v32, %v34
    %v36 = vrot.slane %v28, %v35
    %v37 = vcombine.high %v36, %v36
    %v39 = vunpack.c.l.s4 1966171168
    %v40 = vunpack.c.0.s8 %v39
    %v41 = vlaneseq
    %v42 = vshrl.u32 %v41, 7
    %v43 = vsub.s32 %v40, %v42
    %v44 = vrot.slane %v36, %v43
    %v46 = vunpack.c.l.s4 1966171168
    %v47 = vunpack.c.0.s8 %v46
    %v48 = vlaneseq
    %v49 = vshrl.u32 %v48, 7
    %v50 = vsub.s32 %v47, %v49
    %v51 = vrot.slane %v37, %v50
    %v52 = vlaneseq
    %v53 = vshrl.u32 %v52, 7
    %v54 = vsub.s32 0, %v53
    %v55 = vrot.slane %v44, %v54
    %v56 = vlaneseq
    %v57 = vshrl.u32 %v56, 7
    %v58 = vsub.s32 0, %v57
    %v59 = vrot.slane %v51, %v58
    %v62 = vmul.f32 %v26, %v55
    %v63 = vmul.f32 %v27, %v59
    %vm64 = vcmask 261120
    %v65 = vsel %vm64, %v62, 0.0
    %66 = vadd.xlane.f32.xlu0 %v65
    %v67 = vpop.xlane.xlu0 %66
    %v68 = vsel %vm64, %v63, 0.0
    %69 = vadd.xlane.f32.xlu0 %v68
    %v70 = vpop.xlane.xlu0 %69
    %v73 = vlaneseq
    %v74 = vand.u32 %v73, 127
    %v75 = vlaneseq
    %v76 = vshrl.u32 %v75, 7
    %v77 = vsub.s32 %v74, %v76
    %v78 = vrot.slane %v67, %v77
    %v79 = vlaneseq
    %v80 = vshrl.u32 %v79, 7
    %v81 = vsub.s32 %v74, %v80
    %v82 = vrot.slane %v70, %v81
    %vm83 = vcmask 1041409
    %v84 = vsel %vm83, %v82, %v78
    %vm86 = vcmask 58368
    %87 = vst.msk [vmem:[#allocation5] sm:$0x3] %vm86, %v84
    // Predicated region
    $region14: #{tpu_custom_call.1} parent=1 // pred_check
      _
    $region15: #{tpu_custom_call.1} parent=1 // pred_check_branch
      %89 = sbr.rel (0) target = $region17
    $region16: #{tpu_custom_call.1} parent=1 // pred_region
      %s91 = ssub.s32 32, 32
      %92 = vsyncadd [#allocation4], %s91
      %s94 = sshll.u32 [#allocation5], 4
      %s95 = int_to_ptr.vmem [resolvable:$true] %s94
      %97 = dma.vmem_to_hbm [thread:$0]  %s95, 32, %s2, [#allocation4]
    $region17: #{tpu_custom_call.1} parent=1 // pred_fallthru
      _
    // Predicated region
    $region18: #{tpu_custom_call.1} parent=1 // pred_check
      _
    $region19: #{tpu_custom_call.1} parent=1 // pred_check_branch
      %99 = sbr.rel (0) target = $region21
    $region20: #{tpu_custom_call.1} parent=1 // pred_region
      %100 = dma.done [#allocation4], 32
    $region21: #{tpu_custom_call.1} parent=1 // pred_fallthru
      _
    %101 = vsyncpa [#allocation3], 1
    %102 = vsyncpa [#allocation4], 1

</llo_original>
